<compile_context>
chip_gen: v6e
topology: v6e:2x2x1
jax: 0.10.0
libtpu: 0.0.40
codegen_flags: <defaults>
</compile_context>

<pallas_src>
import math
import functools

import jax
import jax.numpy as jnp
from jax import lax
from jax.experimental import pallas as pl
from jax.experimental.pallas import tpu as pltpu

_BF16 = jnp.bfloat16
_F32 = jnp.float32


# --------------------------------------------------------------------------
# Helpers
# --------------------------------------------------------------------------
def _vmem_limit_bytes(frac=0.8, fallback=48 * 1024 * 1024):
    """Generation-aware VMEM cap: ~102 MiB on v5e/v6e (128 MiB physical),
    ~51 MiB on v7x (64 MiB physical)."""
    try:
        cap = pltpu.get_tpu_info().vmem_capacity_bytes
        return int(cap * frac)
    except Exception:
        return fallback


def _pick_tile(n, preferred=(512, 256, 128, 64, 32, 16, 8)):
    """Largest MXU/lane-friendly tile that divides n (multiples of 128/256 are
    tried first).  TODO(synk): pad + mask instead of falling back to n."""
    for t in preferred:
        if t <= n and n % t == 0:
            return t
    return n


def _invariant_spec(block_shape, index_map):
    """Grid-invariant input: single pipeline buffer (no overlap benefit, halves
    the weight VMEM residency).  Falls back to default double-buffering if the
    installed BlockSpec has no `pipeline_mode`."""
    try:
        return pl.BlockSpec(block_shape, index_map, pipeline_mode=pl.Buffered(1))
    except Exception:
        return pl.BlockSpec(block_shape, index_map)


# --------------------------------------------------------------------------
# Dense layer kernel:  y = (x @ Wt + b) * scale
# --------------------------------------------------------------------------
def _linear_kernel(x_ref, w_ref, b_ref, o_ref, *, scale):
    x = x_ref[...]                                                 # (TS, D) bf16
    y = jnp.dot(x, w_ref[...], preferred_element_type=_F32)       # f32 MXU acc
    y = y + b_ref[...]                                             # f32 bias
    if scale != 1.0:
        y = y * scale
    o_ref[...] = y.astype(o_ref.dtype)


def _linear(x, w_t, b, *, out_dtype, scale=1.0):
    """x: (B, S, D) bf16, w_t: (D, D) bf16 stored (in, out), b: (1, D) f32."""
    B, S, D = x.shape
    ts = _pick_tile(S)
    grid = (B, S // ts)

    x_spec = pl.BlockSpec((None, ts, D), lambda bi, si: (bi, si, 0))
    w_spec = _invariant_spec((D, D), lambda bi, si: (0, 0))
    b_spec = _invariant_spec((1, D), lambda bi, si: (0, 0))
    o_spec = pl.BlockSpec((None, ts, D), lambda bi, si: (bi, si, 0))

    return pl.pallas_call(
        functools.partial(_linear_kernel, scale=scale),
        out_shape=jax.ShapeDtypeStruct((B, S, D), out_dtype),
        grid_spec=pltpu.PrefetchScalarGridSpec(
            num_scalar_prefetch=0,
            grid=grid,
            in_specs=[x_spec, w_spec, b_spec],
            out_specs=o_spec,
        ),
        compiler_params=pltpu.CompilerParams(
            dimension_semantics=("parallel", "parallel"),
            vmem_limit_bytes=_vmem_limit_bytes(),
        ),
    )(x, w_t, b)


# --------------------------------------------------------------------------
# Flash attention kernel over (B, H, q_tiles, kv_tiles)
# --------------------------------------------------------------------------
def _flash_attn_kernel(q_ref, k_ref, v_ref, o_ref, m_ref, l_ref, acc_ref):
    kv = pl.program_id(3)

    q = q_ref[...]   # (TQ,  d_k) bf16, already scaled by 1/sqrt(d_k)
    k = k_ref[...]   # (TKV, d_k) bf16
    v = v_ref[...]   # (TKV, d_k) bf16

    # Contract the shared d_k axis directly (no explicit K transpose).
    s = lax.dot_general(q, k, dimension_numbers=(((1,), (1,)), ((), ())),
                        preferred_element_type=_F32)               # (TQ, TKV) f32
    m_cur = jnp.max(s, axis=-1, keepdims=True)

    @pl.when(kv == 0)
    def _():
        # First KV tile: direct init (no zero-fill + read-modify-write pass).
        p = jnp.exp(s - m_cur)
        m_ref[...] = m_cur
        l_ref[...] = jnp.sum(p, axis=-1, keepdims=True)
        acc_ref[...] = jnp.dot(p.astype(_BF16), v, preferred_element_type=_F32)

    @pl.when(kv > 0)
    def _():
        m_prev = m_ref[...]
        m_new = jnp.maximum(m_prev, m_cur)
        alpha = jnp.exp(m_prev - m_new)
        p = jnp.exp(s - m_new)
        m_ref[...] = m_new
        l_ref[...] = alpha * l_ref[...] + jnp.sum(p, axis=-1, keepdims=True)
        acc_ref[...] = alpha * acc_ref[...] + jnp.dot(
            p.astype(_BF16), v, preferred_element_type=_F32)

    @pl.when(kv == pl.num_programs(3) - 1)
    def _():
        # Single exact f32 normalization at the end (cheap; softmax rows sum to 1).
        # TODO(synk): dropout(p=0.1) on attention probabilities omitted (eval mode).
        o_ref[...] = (acc_ref[...] / l_ref[...]).astype(o_ref.dtype)


def _flash_attention(q, k, v):
    """q/k/v: (B, H, S, d_k) bf16 (q pre-scaled).  Returns (B, H, S, d_k) bf16."""
    B, H, S, d_k = q.shape
    tq = _pick_tile(S, (256, 128, 64, 32, 16, 8))
    tkv = _pick_tile(S, (512, 256, 128, 64, 32, 16, 8))
    grid = (B, H, S // tq, S // tkv)

    q_spec = pl.BlockSpec((None, None, tq, d_k), lambda b, h, qi, ki: (b, h, qi, 0))
    kv_spec = pl.BlockSpec((None, None, tkv, d_k), lambda b, h, qi, ki: (b, h, ki, 0))
    o_spec = pl.BlockSpec((None, None, tq, d_k), lambda b, h, qi, ki: (b, h, qi, 0))

    return pl.pallas_call(
        _flash_attn_kernel,
        out_shape=jax.ShapeDtypeStruct((B, H, S, d_k), _BF16),
        grid_spec=pltpu.PrefetchScalarGridSpec(
            num_scalar_prefetch=0,
            grid=grid,
            in_specs=[q_spec, kv_spec, kv_spec],
            out_specs=o_spec,
            scratch_shapes=[
                pltpu.VMEM((tq, 1), _F32),      # running max
                pltpu.VMEM((tq, 1), _F32),      # running denominator
                pltpu.VMEM((tq, d_k), _F32),    # running numerator
            ],
        ),
        compiler_params=pltpu.CompilerParams(
            dimension_semantics=("parallel", "parallel", "parallel", "arbitrary"),
            vmem_limit_bytes=_vmem_limit_bytes(),
        ),
    )(q, k, v)


# --------------------------------------------------------------------------
# Full MultiHeadedAttention forward
# --------------------------------------------------------------------------
def multi_headed_attention(query, key, value, params, *, n_heads):
    """query/key/value: (B, S, D) float32. params: PyTorch-layout (out,in) W + b."""
    B, S, D = query.shape
    assert D % n_heads == 0
    d_k = D // n_heads
    scale = 1.0 / math.sqrt(d_k)

    # bf16 activations / weights (MXU bf16 peak, half the HBM/VMEM traffic);
    # biases stay f32 and are added after f32 accumulation.
    qx, kx, vx = (t.astype(_BF16) for t in (query, key, value))
    wq, bq = params["wq"].T.astype(_BF16), params["bq"].reshape(1, D).astype(_F32)
    wk, bk = params["wk"].T.astype(_BF16), params["bk"].reshape(1, D).astype(_F32)
    wv, bv = params["wv"].T.astype(_BF16), params["bv"].reshape(1, D).astype(_F32)
    wo, bo = params["wo"].T.astype(_BF16), params["bo"].reshape(1, D).astype(_F32)

    # Q/K/V projections computed exactly once per token (hoisted out of the
    # attention grid); 1/sqrt(d_k) folded into the Q projection output.
    qp = _linear(qx, wq, bq, out_dtype=_BF16, scale=scale)
    kp = _linear(kx, wk, bk, out_dtype=_BF16)
    vp = _linear(vx, wv, bv, out_dtype=_BF16)

    # Head split / merge: wrapper-side layout plumbing (XLA reshape/transpose).
    def split_heads(x):  # (B, S, D) -> (B, H, S, d_k)
        return x.reshape(B, S, n_heads, d_k).transpose(0, 2, 1, 3)

    ctx = _flash_attention(split_heads(qp), split_heads(kp), split_heads(vp))
    ctx = ctx.transpose(0, 2, 1, 3).reshape(B, S, D)       # (B, S, D) bf16

    # Single D-deep output projection (full-width MXU contraction), f32 output.
    return _linear(ctx, wo, bo, out_dtype=_F32)


# --------------------------------------------------------------------------
# Pure-JAX f32 reference (mirrors the PyTorch forward, dropout = identity)
# --------------------------------------------------------------------------
def _reference_mha(query, key, value, params, *, n_heads):
    B, S, D = query.shape
    d_k = D // n_heads

    def lin(x, w, b):
        return x @ w.T + b

    def split_heads(x):
        return x.reshape(B, S, n_heads, d_k).transpose(0, 2, 1, 3)

    q = split_heads(lin(query, params["wq"], params["bq"]))
    k = split_heads(lin(key, params["wk"], params["bk"]))
    v = split_heads(lin(value, params["wv"], params["bv"]))

    scores = jnp.einsum("bhqd,bhkd->bhqk", q, k) / math.sqrt(d_k)
    p = jax.nn.softmax(scores, axis=-1)
    x = jnp.einsum("bhqk,bhkd->bhqd", p, v)
    x = x.transpose(0, 2, 1, 3).reshape(B, S, D)
    return lin(x, params["wo"], params["bo"])


def init_params(key, d_model):
    """Deterministic init mimicking nn.Linear defaults (uniform +-1/sqrt(fan_in))."""
    bound = 1.0 / math.sqrt(d_model)
    names = ["wq", "bq", "wk", "bk", "wv", "bv", "wo", "bo"]
    keys = jax.random.split(key, len(names))
    params = {}
    for name, kk in zip(names, keys):
        shape = (d_model, d_model) if name.startswith("w") else (d_model,)
        params[name] = jax.random.uniform(
            kk, shape, dtype=jnp.float32, minval=-bound, maxval=bound)
    return params


if __name__ == "__main__":
    B, S, D, H = 2, 8, 32, 4  # batch, seq, d_model, heads (d_k = 8)

    root = jax.random.PRNGKey(0)
    kq, kk, kv, kp = jax.random.split(root, 4)
    query = jax.random.normal(kq, (B, S, D), dtype=jnp.float32)
    key = jax.random.normal(kk, (B, S, D), dtype=jnp.float32)
    value = jax.random.normal(kv, (B, S, D), dtype=jnp.float32)
    params = init_params(kp, D)

    out = multi_headed_attention(query, key, value, params, n_heads=H)
    out = jax.block_until_ready(out)

    ref = _reference_mha(query, key, value, params, n_heads=H)
    assert out.shape == (B, S, D) and out.dtype == jnp.float32
    # bf16 MXU operands -> loosened tolerance vs. the f32 reference.
    assert jnp.allclose(out, ref, atol=5e-2, rtol=5e-2), "mismatch vs reference"

    print("KERNEL_OK")
</pallas_src>

<mosaic_0001>
module attributes {stable_mosaic.version = 11 : i64} {
  func.func @_linear_kernel(%arg0: i32, %arg1: i32, %arg2: memref<1x8x32xbf16, #tpu.memory_space<vmem>>, %arg3: memref<32x32xbf16, #tpu.memory_space<vmem>>, %arg4: memref<1x32xf32, #tpu.memory_space<vmem>>, %arg5: memref<1x8x32xbf16, #tpu.memory_space<vmem>>) attributes {dimension_semantics = [#tpu.dimension_semantics<parallel>, #tpu.dimension_semantics<parallel>], iteration_bounds = array<i64: 2, 1>, scalar_prefetch = 0 : i64, scratch_operands = 0 : i64, tpu.core_type = #tpu.core_type<tc>, window_params = [{transform_indices = @transform_0, window_bounds = array<i64: 1, 8, 32>}, {pipeline_mode = #tpu.pipeline_mode<synchronous>, transform_indices = @transform_1, window_bounds = array<i64: 32, 32>}, {pipeline_mode = #tpu.pipeline_mode<synchronous>, transform_indices = @transform_2, window_bounds = array<i64: 1, 32>}, {transform_indices = @transform_3, window_bounds = array<i64: 1, 8, 32>}]} {
    %c0 = arith.constant 0 : index
    %c0_0 = arith.constant 0 : index
    %c0_1 = arith.constant 0 : index
    %0 = vector.load %arg2[%c0, %c0_0, %c0_1] : memref<1x8x32xbf16, #tpu.memory_space<vmem>>, vector<1x8x32xbf16>
    %1 = vector.shape_cast %0 : vector<1x8x32xbf16> to vector<8x32xbf16>
    %c0_2 = arith.constant 0 : index
    %c0_3 = arith.constant 0 : index
    %2 = vector.load %arg3[%c0_2, %c0_3] : memref<32x32xbf16, #tpu.memory_space<vmem>>, vector<32x32xbf16>
    %cst = arith.constant dense<0.000000e+00> : vector<8x32xf32>
    %3 = tpu.matmul %1, %2, %cst {dimension_numbers = #tpu.dot_dimension_numbers<[1], [0], [0], [1], [0, 0, 1, 1], [], []>} : vector<8x32xbf16>, vector<32x32xbf16>, vector<8x32xf32> -> vector<8x32xf32>
    %c0_4 = arith.constant 0 : index
    %c0_5 = arith.constant 0 : index
    %4 = vector.load %arg4[%c0_4, %c0_5] : memref<1x32xf32, #tpu.memory_space<vmem>>, vector<1x32xf32>
    %5 = vector.broadcast %4 : vector<1x32xf32> to vector<8x32xf32>
    %6 = arith.addf %3, %5 : vector<8x32xf32>
    %cst_6 = arith.constant 0.353553385 : f32
    %7 = vector.broadcast %cst_6 : f32 to vector<8x32xf32>
    %8 = arith.mulf %6, %7 : vector<8x32xf32>
    %9 = arith.truncf %8 : vector<8x32xf32> to vector<8x32xbf16>
    %c0_7 = arith.constant 0 : index
    %c0_8 = arith.constant 0 : index
    %c0_9 = arith.constant 0 : index
    %10 = vector.load %arg5[%c0_7, %c0_8, %c0_9] : memref<1x8x32xbf16, #tpu.memory_space<vmem>>, vector<1x8x32xbf16>
    %11 = vector.shape_cast %10 : vector<1x8x32xbf16> to vector<8x32xbf16>
    %12 = vector.shape_cast %9 : vector<8x32xbf16> to vector<1x8x32xbf16>
    tpu.vector_store %arg5[%c0_7, %c0_8, %c0_9], %12 {strides = array<i32>} : memref<1x8x32xbf16, #tpu.memory_space<vmem>>, vector<1x8x32xbf16>,
    return
  }
  func.func @transform_0(%arg0: i32, %arg1: i32) -> (i32, i32, i32) {
    %c0_i32 = arith.constant 0 : i32
    %c0_i32_0 = arith.constant 0 : i32
    return %arg0, %arg1, %c0_i32 : i32, i32, i32
  }
  func.func @transform_1(%arg0: i32, %arg1: i32) -> (i32, i32) {
    %c0_i32 = arith.constant 0 : i32
    %c0_i32_0 = arith.constant 0 : i32
    %c0_i32_1 = arith.constant 0 : i32
    return %c0_i32, %c0_i32_0 : i32, i32
  }
  func.func @transform_2(%arg0: i32, %arg1: i32) -> (i32, i32) {
    %c0_i32 = arith.constant 0 : i32
    %c0_i32_0 = arith.constant 0 : i32
    %c0_i32_1 = arith.constant 0 : i32
    return %c0_i32, %c0_i32_0 : i32, i32
  }
  func.func @transform_3(%arg0: i32, %arg1: i32) -> (i32, i32, i32) {
    %c0_i32 = arith.constant 0 : i32
    %c0_i32_0 = arith.constant 0 : i32
    return %arg0, %arg1, %c0_i32 : i32, i32, i32
  }
}

</mosaic_0001>

<llo_original>
// kernel: tpu_custom_call.1
$region0: #{tpu_custom_call.1}
  #allocation0 [shape = 'u32[]', space=smem, size = 0x4, offset = 0x4, fixed_abs, tag = 'smem constant byte address 0x4 - core index']
  #allocation1 [shape = 'u32[144,128]{1,0:T(1,128)}', space=vmem, size = 0x12000, scoped, tag = 'internal scratch']
  %s0 = inlined_call_operand.hbm [shape: bf16[2,8,32], index: 0, kind: input, shape index: {}]
  %s1 = inlined_call_operand.hbm [shape: bf16[32,32], index: 1, kind: input, shape index: {}]
  %s2 = inlined_call_operand.vmem [shape: f32[1,32], index: 2, kind: input, shape index: {}]
  %s3 = inlined_call_operand.hbm [shape: bf16[2,8,32], index: 3, kind: output, shape index: {}]
  %s4 = sld [smem:[#allocation0]]
  $region53: #{tpu_custom_call.1} parent=0
    _
  %s6 = ssub.s32 1, %s4
  %s7 = scalar_select 0, %s6, %s4
  $region1: #{tpu_custom_call.1} parent=0
    #allocation2 [shape = 'u8[4096]{0}', space=vmem, size = 0x1000, scoped, tag = 'input window, operand 0']
    #allocation3 [shape = 's32[2]{0}', space=sflag, size = 0x8, scoped, tag = 'scoped memory for tpu_custom_call.1']
    #allocation4 [shape = 's32[2]{0}', space=sflag, size = 0x8, scoped, tag = 'scoped memory for tpu_custom_call.1']
    #allocation5 [shape = 'u8[8192]{0}', space=vmem, size = 0x2000, scoped, tag = 'input window, operand 1, single buffered']
    #allocation6 [shape = 's32[1]{0}', space=sflag, size = 0x4, scoped, tag = 'scoped memory for tpu_custom_call.1']
    #allocation7 [shape = 'u8[4096]{0}', space=vmem, size = 0x1000, scoped, tag = 'output window, operand 0']
    %8 = vsyncpa [#allocation3], 0
    %s9 = scalar_lea.sflag [#allocation3], 1
    %10 = vsyncpa %s9, 0
    %11 = vsyncpa [#allocation6], 0
    %12 = vsyncpa [#allocation4], 0
    %s13 = scalar_lea.sflag [#allocation4], 1
    %14 = vsyncpa %s13, 0
    loop: start=0, step=1, limit=4
    $region2: #{tpu_custom_call.1} parent=1 // loop_pre_header
      _
    $region3: #{tpu_custom_call.1} parent=1 // loop_header
      %s16 = sphi 0, %s20
      %p17 = scmp.ge.s32.totalorder %s16, 4
      %s23 = sphi 0, %s35
      %s24 = sphi 0, %s31
      %s25 = sphi 0, %s23
      %s26 = sphi 0, %s24
      %s27 = sphi 0, %s25
      %s28 = sphi 0, %s26
      %s40 = sphi 0, %s42
      %s43 = sphi 0, %s40
      %s44 = sphi 0, %s43
      %s60 = sphi 0, %s44
      %s64 = sphi 0, %s64
      %s66 = sphi 0, %s64
      %s67 = sphi 0, %s66
      %s81 = sphi 0, %s67
      %s85 = sphi 0, %s85
      %s87 = sphi 0, %s85
      %s88 = sphi 0, %s87
      %s102 = sphi 0, %s88
      %s110 = sphi 0, %s112
      %s113 = sphi 0, %s110
      %s114 = sphi 0, %s113
      %s130 = sphi 0, %s114
    $region4: #{tpu_custom_call.1} parent=1 // loop_header_branch
      %19 = sbr.rel (%p17) target = $region8
    $region5: #{tpu_custom_call.1} parent=1 // loop_body
      %s21 = ssub.s32 %s16, 1
      %s22 = ssub.s32 %s16, 2
      %s29 = sadd.s32 1, %s24
      %p30 = scmp.ge.s32.totalorder %s29, 1
      %s31 = scalar_select %p30, 0, %s29
      %s32 = sadd.s32 1, %s23
      %s33 = scalar_select %p30, %s32, %s23
      %p34 = scmp.ge.s32.totalorder %s33, 2
      %s35 = scalar_select %p34, 0, %s33
      %s36 = ssub.s32 %s23, %s35
      %s37 = ssub.s32 %s24, %s31
      %s38 = sor.u32 %s36, %s37
      %p39 = scmp.eq.s32.totalorder %s38, 0
      %s41 = sadd.s32 %s40, 1
      %s42 = scalar_select %p39, %s40, %s41
      %p45 = pneg %p39
      %p46 = scmp.eq.s32.totalorder %s16, 1
      %p47 = por %p45, %p46
      %p48 = scmp.ne.s32.totalorder %s40, %s43
      %p49 = scmp.eq.s32.totalorder %s16, 0
      %p50 = por %p48, %p49
      %p51 = scmp.ne.s32.totalorder %s40, %s43
      %p52 = scmp.eq.s32.totalorder %s21, 1
      %p53 = por %p51, %p52
      %p54 = scmp.ne.s32.totalorder %s43, %s44
      %p55 = scmp.eq.s32.totalorder %s21, 0
      %p56 = por %p54, %p55
      %p57 = scmp.ne.s32.totalorder %s43, %s44
      %p58 = scmp.eq.s32.totalorder %s22, 1
      %p59 = por %p57, %p58
      %p61 = scmp.ne.s32.totalorder %s44, %s60
      %p62 = scmp.eq.s32.totalorder %s22, 0
      %p63 = por %p61, %p62
      %s65 = sadd.s32 %s64, 1
      %p68 = scmp.eq.s32.totalorder %s16, 1
      %p69 = scmp.ne.s32.totalorder %s64, %s66
      %p70 = scmp.eq.s32.totalorder %s16, 0
      %p71 = por %p69, %p70
      %p72 = scmp.ne.s32.totalorder %s64, %s66
      %p73 = scmp.eq.s32.totalorder %s21, 1
      %p74 = por %p72, %p73
      %p75 = scmp.ne.s32.totalorder %s66, %s67
      %p76 = scmp.eq.s32.totalorder %s21, 0
      %p77 = por %p75, %p76
      %p78 = scmp.ne.s32.totalorder %s66, %s67
      %p79 = scmp.eq.s32.totalorder %s22, 1
      %p80 = por %p78, %p79
      %p82 = scmp.ne.s32.totalorder %s67, %s81
      %p83 = scmp.eq.s32.totalorder %s22, 0
      %p84 = por %p82, %p83
      %s86 = sadd.s32 %s85, 1
      %p89 = scmp.eq.s32.totalorder %s16, 1
      %p90 = scmp.ne.s32.totalorder %s85, %s87
      %p91 = scmp.eq.s32.totalorder %s16, 0
      %p92 = por %p90, %p91
      %p93 = scmp.ne.s32.totalorder %s85, %s87
      %p94 = scmp.eq.s32.totalorder %s21, 1
      %p95 = por %p93, %p94
      %p96 = scmp.ne.s32.totalorder %s87, %s88
      %p97 = scmp.eq.s32.totalorder %s21, 0
      %p98 = por %p96, %p97
      %p99 = scmp.ne.s32.totalorder %s87, %s88
      %p100 = scmp.eq.s32.totalorder %s22, 1
      %p101 = por %p99, %p100
      %p103 = scmp.ne.s32.totalorder %s88, %s102
      %p104 = scmp.eq.s32.totalorder %s22, 0
      %p105 = por %p103, %p104
      %s106 = ssub.s32 %s23, %s35
      %s107 = ssub.s32 %s24, %s31
      %s108 = sor.u32 %s106, %s107
      %p109 = scmp.eq.s32.totalorder %s108, 0
      %s111 = sadd.s32 %s110, 1
      %s112 = scalar_select %p109, %s110, %s111
      %p115 = pneg %p109
      %p116 = scmp.eq.s32.totalorder %s16, 1
      %p117 = por %p115, %p116
      %p118 = scmp.ne.s32.totalorder %s110, %s113
      %p119 = scmp.eq.s32.totalorder %s16, 0
      %p120 = por %p118, %p119
      %p121 = scmp.ne.s32.totalorder %s110, %s113
      %p122 = scmp.eq.s32.totalorder %s21, 1
      %p123 = por %p121, %p122
      %p124 = scmp.ne.s32.totalorder %s113, %s114
      %p125 = scmp.eq.s32.totalorder %s21, 0
      %p126 = por %p124, %p125
      %p127 = scmp.ne.s32.totalorder %s113, %s114
      %p128 = scmp.eq.s32.totalorder %s22, 1
      %p129 = por %p127, %p128
      %p131 = scmp.ne.s32.totalorder %s114, %s130
      %p132 = scmp.eq.s32.totalorder %s22, 0
      %p133 = por %p131, %p132
      %p134 = scmp.le.s32.totalorder 1, %s16
      %p135 = scmp.lt.s32.totalorder %s16, 3
      %p136 = pnand %p134, %p135
      %p137 = pneg %p136
      // Predicated region
      $region9: #{tpu_custom_call.1} parent=5 // pred_check
        _
      $region10: #{tpu_custom_call.1} parent=5 // pred_check_branch
        %139 = sbr.rel (%p136) target = $region12
      $region11: #{tpu_custom_call.1} parent=5 // pred_region
        %s140 = ssub.s32 %s16, 1
        // Predicated region
        $region13: #{tpu_custom_call.1} parent=11 // pred_check
          %p141 = pneg %p77
        $region14: #{tpu_custom_call.1} parent=11 // pred_check_branch
          %143 = sbr.rel (%p141) target = $region16
        $region15: #{tpu_custom_call.1} parent=11 // pred_region
          %s145 = ssub.s32 256, 256
          %146 = vsyncadd [#allocation6], %s145
          %s147 = sshll.u32 [#allocation5], 4
          %s148 = int_to_ptr.vmem [resolvable:$true] %s147
          %153 = dma.hbm_to_vmem [thread:$0]  %s1, 256, %s148, [#allocation6], 64, 64, 4
        $region16: #{tpu_custom_call.1} parent=11 // pred_fallthru
          _
        // Predicated region
        $region17: #{tpu_custom_call.1} parent=11 // pred_check
          %p154 = pneg %p98
        $region18: #{tpu_custom_call.1} parent=11 // pred_check_branch
          %156 = sbr.rel (%p154) target = $region20
        $region19: #{tpu_custom_call.1} parent=11 // pred_region
          _
        $region20: #{tpu_custom_call.1} parent=11 // pred_fallthru
          _
      $region12: #{tpu_custom_call.1} parent=5 // pred_fallthru
        _
      %p157 = scmp.lt.s32.totalorder %s16, 2
      // Predicated region
      $region21: #{tpu_custom_call.1} parent=5 // pred_check
        %p158 = pneg %p157
      $region22: #{tpu_custom_call.1} parent=5 // pred_check_branch
        %160 = sbr.rel (%p158) target = $region24
      $region23: #{tpu_custom_call.1} parent=5 // pred_region
        // Predicated region
        $region25: #{tpu_custom_call.1} parent=23 // pred_check
          %p161 = pneg %p50
        $region26: #{tpu_custom_call.1} parent=23 // pred_check_branch
          %163 = sbr.rel (%p161) target = $region28
        $region27: #{tpu_custom_call.1} parent=23 // pred_region
          %s164 = sand.u32 %s40, 1
          %s165 = scalar_lea.sflag [#allocation3], %s164
          %s166 = sand.u32 %s40, 1
          %s167 = smul.addr %s166, 4
          %s168 = scalar_lea.vmem [#allocation2], %s167
          %s170 = ssub.s32 64, 64
          %171 = vsyncadd %s165, %s170
          %s172 = sadd.s32 %s24, %s23
          %s173 = smul.addr %s172, 64
          %s174 = scalar_lea.hbm %s0, %s173
          %s176 = sshll.u32 %s168, 4
          %s177 = int_to_ptr.vmem [resolvable:$true] %s176
          %179 = dma.hbm_to_vmem [thread:$0]  %s174, 64, %s177, %s165
        $region28: #{tpu_custom_call.1} parent=23 // pred_fallthru
          _
      $region24: #{tpu_custom_call.1} parent=5 // pred_fallthru
        _
      %p180 = scmp.le.s32.totalorder 1, %s16
      %p181 = scmp.lt.s32.totalorder %s16, 3
      %p182 = pnand %p180, %p181
      %p183 = pneg %p182
      // Predicated region
      $region29: #{tpu_custom_call.1} parent=5 // pred_check
        _
      $region30: #{tpu_custom_call.1} parent=5 // pred_check_branch
        %185 = sbr.rel (%p182) target = $region32
      $region31: #{tpu_custom_call.1} parent=5 // pred_region
        %s186 = ssub.s32 %s16, 1
        %s187 = sand.u32 %s43, 1
        %s188 = scalar_lea.sflag [#allocation3], %s187
        %s189 = sand.u32 %s43, 1
        %s190 = smul.addr %s189, 4
        %s191 = scalar_lea.vmem [#allocation2], %s190
        // Predicated region
        $region33: #{tpu_custom_call.1} parent=31 // pred_check
          %p192 = pneg %p56
        $region34: #{tpu_custom_call.1} parent=31 // pred_check_branch
          %194 = sbr.rel (%p192) target = $region36
        $region35: #{tpu_custom_call.1} parent=31 // pred_region
          %195 = dma.done %s188, 64
        $region36: #{tpu_custom_call.1} parent=31 // pred_fallthru
          _
        // Predicated region
        $region37: #{tpu_custom_call.1} parent=31 // pred_check
          %p196 = pneg %p77
        $region38: #{tpu_custom_call.1} parent=31 // pred_check_branch
          %198 = sbr.rel (%p196) target = $region40
        $region39: #{tpu_custom_call.1} parent=31 // pred_region
          %199 = dma.done [#allocation6], 256
        $region40: #{tpu_custom_call.1} parent=31 // pred_fallthru
          _
        %s200 = sand.u32 %s43, 1
        %s201 = scalar_lea.sflag [#allocation3], %s200
        %s202 = sand.u32 %s43, 1
        %s203 = smul.addr %s202, 4
        %s204 = scalar_lea.vmem [#allocation2], %s203
        %p205 = pneg %p56
        %p206 = pneg %p53
        %p207 = pneg %p77
        %p208 = pneg %p74
        %p209 = pneg %p98
        %p210 = pneg %p95
        %p211 = pneg %p126
        %p212 = pneg %p123
        %s213 = sand.u32 %s113, 1
        %s214 = scalar_lea.sflag [#allocation4], %s213
        %s215 = sand.u32 %s113, 1
        %s216 = smul.addr %s215, 4
        %s217 = scalar_lea.vmem [#allocation7], %s216
        %v219 = vld [vmem:[%s191] sm:$0xf]
        %v220 = vld [vmem:[#allocation5] sm:$0xf]
        %v221 = vld [vmem:[#allocation5 + $0x4] sm:$0xf]
        %v222 = vld [vmem:[#allocation5 + $0x8] sm:$0xf]
        %v223 = vld [vmem:[#allocation5 + $0xc] sm:$0xf]
        %v224 = vld [vmem:[%s2] sm:$0x1]
        %v226 = vlaneseq
        %v227 = vshrl.u32 %v226, 7
        %v228 = vsub.s32 0, %v227
        %v229 = vrot.slane %v224, %v228
        %v235 = vunpack.c.l.b16 %v220
        %v236 = vunpack.c.l.b16 %v221
        %v237 = vunpack.c.l.b16 %v222
        %v238 = vunpack.c.l.b16 %v223
        %v239 = vpack.c.b16 %v236, %v235
        %v240 = vpack.c.b16 %v238, %v237
        %vm243 = vcmask 261120
        %v245 = vsel %vm243, %v219, 0
        %247 = vmatprep.subr.bf16.mxu0 0
        %248 = vmatpush1.bf16.msra.mxu0 0
        %249 = vmatprep.subr.bf16.mxu0 0
        %250 = vmatpush1.bf16.msra.mxu0 0
        %251 = vmatprep.subr.bf16.mxu0 0
        %252 = vmatpush1.bf16.msra.mxu0 0
        %253 = vmatprep.subr.bf16.mxu0 0
        %254 = vmatpush1.bf16.msra.mxu0 0
        %255 = vmatprep.subr.bf16.mxu0 0
        %256 = vmatpush1.bf16.msra.mxu0 0
        %257 = vmatprep.subr.bf16.mxu0 0
        %258 = vmatpush1.bf16.msra.mxu0 0
        %259 = vmatprep.subr.bf16.mxu0 0
        %260 = vmatpush1.bf16.msra.mxu0 %v240
        %261 = vmatprep.subr.bf16.mxu0 0
        %262 = vmatpush1.bf16.msra.mxu0 %v239
        %263 = vmatprep.subr.bf16.mxu0 0
        %264 = vmatpush2.bf16.msra.mxu0 0
        %265 = vmatprep.subr.bf16.mxu0 0
        %266 = vmatpush2.bf16.msra.mxu0 0
        %267 = vmatprep.subr.bf16.mxu0 0
        %268 = vmatpush2.bf16.msra.mxu0 0
        %269 = vmatprep.subr.bf16.mxu0 0
        %270 = vmatpush2.bf16.msra.mxu0 0
        %271 = vmatprep.subr.bf16.mxu0 0
        %272 = vmatpush2.bf16.msra.mxu0 0
        %273 = vmatprep.subr.bf16.mxu0 0
        %274 = vmatpush2.bf16.msra.mxu0 0
        %275 = vmatprep.subr.bf16.mxu0 0
        %276 = vmatpush2.bf16.msra.mxu0 0
        %277 = vmatprep.subr.bf16.mxu0 0
        %278 = vmatpush2.bf16.msra.mxu0 0
        %279 = vmatprep.mubr.bf16.mxu0 0
        %280 = vmatmul.mubr.bf16.gmra.mxu0 %v245
        %v281 = vpop.f32.mrf.mxu0
        %v282 = vadd.f32 %v229, %v281
        %v283 = vpop.f32.mrf.mxu0
        %v284 = vpop.f32.mrf.mxu0
        %v285 = vpop.f32.mrf.mxu0
        %286 = vdwg.mxu0
        %v287 = vmul.f32 %v282, 0.35355338
        %v288 = vpack.c.bf16 %v287, %v287
        %vm289 = vcmask 257024
        %290 = vst.msk [vmem:[%s217] sm:$0xf] %vm289, %v288
        %s291 = sand.u32 %s113, 1
        %s292 = scalar_lea.sflag [#allocation4], %s291
        %s293 = sand.u32 %s113, 1
        %s294 = smul.addr %s293, 4
        %s295 = scalar_lea.vmem [#allocation7], %s294
        // Predicated region
        $region41: #{tpu_custom_call.1} parent=31 // pred_check
          %p296 = pneg %p123
        $region42: #{tpu_custom_call.1} parent=31 // pred_check_branch
          %298 = sbr.rel (%p296) target = $region44
        $region43: #{tpu_custom_call.1} parent=31 // pred_region
          %s300 = ssub.s32 64, 64
          %301 = vsyncadd %s292, %s300
          %s302 = sadd.s32 %s26, %s25
          %s303 = smul.addr %s302, 64
          %s304 = scalar_lea.hbm %s3, %s303
          %s306 = sshll.u32 %s295, 4
          %s307 = int_to_ptr.vmem [resolvable:$true] %s306
          %309 = dma.vmem_to_hbm [thread:$0]  %s307, 64, %s304, %s292
        $region44: #{tpu_custom_call.1} parent=31 // pred_fallthru
          _
      $region32: #{tpu_custom_call.1} parent=5 // pred_fallthru
        _
      %p310 = scmp.le.s32.totalorder 2, %s16
      // Predicated region
      $region45: #{tpu_custom_call.1} parent=5 // pred_check
        %p311 = pneg %p310
      $region46: #{tpu_custom_call.1} parent=5 // pred_check_branch
        %313 = sbr.rel (%p311) target = $region48
      $region47: #{tpu_custom_call.1} parent=5 // pred_region
        %s314 = ssub.s32 %s16, 2
        // Predicated region
        $region49: #{tpu_custom_call.1} parent=47 // pred_check
          %p315 = pneg %p129
        $region50: #{tpu_custom_call.1} parent=47 // pred_check_branch
          %317 = sbr.rel (%p315) target = $region52
        $region51: #{tpu_custom_call.1} parent=47 // pred_region
          %s318 = sand.u32 %s114, 1
          %s319 = scalar_lea.sflag [#allocation4], %s318
          %s320 = sand.u32 %s114, 1
          %s321 = smul.addr %s320, 4
          %s322 = scalar_lea.vmem [#allocation7], %s321
          %323 = dma.done %s319, 64
        $region52: #{tpu_custom_call.1} parent=47 // pred_fallthru
          _
      $region48: #{tpu_custom_call.1} parent=5 // pred_fallthru
        _
    $region6: #{tpu_custom_call.1} parent=1 // loop_footer
      %s20 = sadd.s32 1, %s16
    $region7: #{tpu_custom_call.1} parent=1 // loop_footer_branch
      %15 = sbr.rel target = $region3
    $region8: #{tpu_custom_call.1} parent=1 // loop_exit
      _
    %324 = vsyncpa [#allocation3], 1
    %s325 = scalar_lea.sflag [#allocation3], 1
    %326 = vsyncpa %s325, 1
    %327 = vsyncpa [#allocation6], 1
    %328 = vsyncpa [#allocation4], 1
    %s329 = scalar_lea.sflag [#allocation4], 1
    %330 = vsyncpa %s329, 1

</llo_original>
